<compile_context>
chip_gen: v7x
topology: tpu7x:2x2x1
jax: 0.10.0
libtpu: 0.0.40
codegen_flags: <defaults>
</compile_context>

<pallas_src>
import jax
import jax.numpy as jnp
from jax.experimental import pallas as pl
from jax.experimental.pallas import tpu as pltpu

EPS = 1e-5  # PyTorch nn.LayerNorm default


def layernorm_kernel(x_ref, gamma_ref, o_ref):
    # x_ref: (TILE_ROWS, D), gamma_ref: (1, D), o_ref: (TILE_ROWS, D)
    x = x_ref[...].astype(jnp.float32)
    mean = jnp.mean(x, axis=-1, keepdims=True)
    centered = x - mean
    var = jnp.mean(centered * centered, axis=-1, keepdims=True)  # biased, like PyTorch
    y = centered * jax.lax.rsqrt(var + EPS)                      # rsqrt -> EUP (free slot)
    scale = gamma_ref[...].astype(jnp.float32) + 1.0             # x * (gamma + 1), no beta
    o_ref[...] = (y * scale).astype(o_ref.dtype)


def _round_up(v, m):
    return ((v + m - 1) // m) * m


def layer_norm(x, gamma, *, tile_rows=None, vmem_limit_bytes=48 * 1024 * 1024):
    """x: (..., D), gamma: (D,). Returns same shape/dtype as x."""
    orig_shape = x.shape
    D = orig_shape[-1]
    x2 = x.reshape(-1, D)
    rows = x2.shape[0]
    itemsize = jnp.dtype(x.dtype).itemsize

    # Sublane packing factor: 8 rows for 32-bit, 16 for bf16, 32 for 8-bit dtypes.
    sublane = max(8, 32 // itemsize)

    if tile_rows is None:
        # Purely HBM-bandwidth bound: pick the largest row tile whose
        # double-buffered (input + output) blocks fit a ~32 MiB VMEM budget
        # (leaves headroom inside the raised vmem_limit and v7x's 64 MiB VMEM).
        tile_budget_bytes = 32 * 1024 * 1024
        cap = max(sublane, tile_budget_bytes // (4 * D * itemsize))
        tile_rows = min(512, cap)

    # Never larger than the (sublane-rounded) problem, and keep it a multiple
    # of the sublane packing factor.
    tile_rows = min(tile_rows, _round_up(rows, sublane))
    tile_rows = max(sublane, (tile_rows // sublane) * sublane)

    grid = (pl.cdiv(rows, tile_rows),)  # ragged last block handled by Pallas; no host pad/slice
    gamma2 = gamma.reshape(1, D)

    out = pl.pallas_call(
        layernorm_kernel,
        out_shape=jax.ShapeDtypeStruct((rows, D), x.dtype),
        grid_spec=pltpu.PrefetchScalarGridSpec(
            num_scalar_prefetch=0,
            grid=grid,
            in_specs=[
                pl.BlockSpec((tile_rows, D), lambda i: (i, 0)),
                pl.BlockSpec((1, D), lambda i: (0, 0)),
            ],
            out_specs=pl.BlockSpec((tile_rows, D), lambda i: (i, 0)),
        ),
        compiler_params=pltpu.CompilerParams(
            dimension_semantics=("parallel",),   # shards the row grid across TCs on v7x
            vmem_limit_bytes=vmem_limit_bytes,
        ),
    )(x2, gamma2)

    return out.reshape(orig_shape)


if __name__ == "__main__":
    key = jax.random.PRNGKey(0)
    B, N, D = 2, 8, 32
    x = jax.random.normal(key, (B, N, D), dtype=jnp.float32)

    # Deterministic param init matching nn.Parameter(torch.zeros(dim))
    gamma = jnp.zeros((D,), dtype=jnp.float32)

    out = layer_norm(x, gamma)
    jax.block_until_ready(out)

    # Plain-JAX reference: LayerNorm (no affine) then * (gamma + 1)
    mean = jnp.mean(x, axis=-1, keepdims=True)
    var = jnp.mean((x - mean) ** 2, axis=-1, keepdims=True)
    ref = (x - mean) / jnp.sqrt(var + EPS) * (gamma + 1.0)
    assert jnp.allclose(out, ref, atol=1e-5, rtol=1e-5)

    print("KERNEL_OK")
</pallas_src>

<mosaic_0001>
module attributes {stable_mosaic.version = 11 : i64} {
  func.func @layernorm_kernel(%arg0: i32, %arg1: memref<16x32xf32, #tpu.memory_space<vmem>>, %arg2: memref<1x32xf32, #tpu.memory_space<vmem>>, %arg3: memref<16x32xf32, #tpu.memory_space<vmem>>) attributes {dimension_semantics = [#tpu.dimension_semantics<parallel>], iteration_bounds = array<i64: 1>, scalar_prefetch = 0 : i64, scratch_operands = 0 : i64, tpu.core_type = #tpu.core_type<tc>, window_params = [{transform_indices = @transform_0, window_bounds = array<i64: 16, 32>}, {pipeline_mode = #tpu.pipeline_mode<synchronous>, transform_indices = @transform_1, window_bounds = array<i64: 1, 32>}, {transform_indices = @transform_2, window_bounds = array<i64: 16, 32>}]} {
    %c0 = arith.constant 0 : index
    %c0_0 = arith.constant 0 : index
    %0 = vector.load %arg1[%c0, %c0_0] : memref<16x32xf32, #tpu.memory_space<vmem>>, vector<16x32xf32>
    %cst = arith.constant dense<0.000000e+00> : vector<16xf32>
    %1 = vector.multi_reduction <add>, %0, %cst [1] : vector<16x32xf32> to vector<16xf32>
    %2 = vector.shape_cast %1 : vector<16xf32> to vector<16x1xf32>
    %cst_1 = arith.constant 3.200000e+01 : f32
    %3 = vector.broadcast %cst_1 : f32 to vector<16x1xf32>
    %4 = arith.divf %2, %3 : vector<16x1xf32>
    %5 = vector.broadcast %4 : vector<16x1xf32> to vector<16x32xf32>
    %6 = arith.subf %0, %5 : vector<16x32xf32>
    %7 = arith.mulf %6, %6 : vector<16x32xf32>
    %cst_2 = arith.constant dense<0.000000e+00> : vector<16xf32>
    %8 = vector.multi_reduction <add>, %7, %cst_2 [1] : vector<16x32xf32> to vector<16xf32>
    %9 = vector.shape_cast %8 : vector<16xf32> to vector<16x1xf32>
    %cst_3 = arith.constant 3.200000e+01 : f32
    %10 = vector.broadcast %cst_3 : f32 to vector<16x1xf32>
    %11 = arith.divf %9, %10 : vector<16x1xf32>
    %cst_4 = arith.constant 9.99999974E-6 : f32
    %12 = vector.broadcast %cst_4 : f32 to vector<16x1xf32>
    %13 = arith.addf %11, %12 : vector<16x1xf32>
    %14 = math.rsqrt %13 : vector<16x1xf32>
    %15 = vector.broadcast %14 : vector<16x1xf32> to vector<16x32xf32>
    %16 = arith.mulf %6, %15 : vector<16x32xf32>
    %c0_5 = arith.constant 0 : index
    %c0_6 = arith.constant 0 : index
    %17 = vector.load %arg2[%c0_5, %c0_6] : memref<1x32xf32, #tpu.memory_space<vmem>>, vector<1x32xf32>
    %cst_7 = arith.constant 1.000000e+00 : f32
    %18 = vector.broadcast %cst_7 : f32 to vector<1x32xf32>
    %19 = arith.addf %17, %18 : vector<1x32xf32>
    %20 = vector.broadcast %19 : vector<1x32xf32> to vector<16x32xf32>
    %21 = arith.mulf %16, %20 : vector<16x32xf32>
    %c0_8 = arith.constant 0 : index
    %c0_9 = arith.constant 0 : index
    %22 = vector.load %arg3[%c0_8, %c0_9] : memref<16x32xf32, #tpu.memory_space<vmem>>, vector<16x32xf32>
    tpu.vector_store %arg3[%c0_8, %c0_9], %21 {strides = array<i32>} : memref<16x32xf32, #tpu.memory_space<vmem>>, vector<16x32xf32>,
    return
  }
  func.func @transform_0(%arg0: i32) -> (i32, i32) {
    %c0_i32 = arith.constant 0 : i32
    %c0_i32_0 = arith.constant 0 : i32
    return %arg0, %c0_i32 : i32, i32
  }
  func.func @transform_1(%arg0: i32) -> (i32, i32) {
    %c0_i32 = arith.constant 0 : i32
    %c0_i32_0 = arith.constant 0 : i32
    %c0_i32_1 = arith.constant 0 : i32
    return %c0_i32, %c0_i32_0 : i32, i32
  }
  func.func @transform_2(%arg0: i32) -> (i32, i32) {
    %c0_i32 = arith.constant 0 : i32
    %c0_i32_0 = arith.constant 0 : i32
    return %arg0, %c0_i32 : i32, i32
  }
}

</mosaic_0001>

<llo_original>
// kernel: tpu_custom_call.1
$region0: #{tpu_custom_call.1}
  #allocation0 [shape = 'u32[]', space=smem, size = 0x4, offset = 0x4, fixed_abs, tag = 'smem constant byte address 0x4 - core index']
  #allocation1 [shape = 'u32[144,128]{1,0:T(1,128)}', space=vmem, size = 0x12000, scoped, tag = 'internal scratch']
  %s0 = inlined_call_operand.hbm [shape: f32[16,32], index: 0, kind: input, shape index: {}]
  %s1 = inlined_call_operand.vmem [shape: f32[1,32], index: 1, kind: input, shape index: {}]
  %s2 = inlined_call_operand.hbm [shape: f32[16,32], index: 2, kind: output, shape index: {}]
  %s3 = sld [smem:[#allocation0]]
  $region22: #{tpu_custom_call.1} parent=0
    _
  %s5 = ssub.s32 1, %s3
  %s6 = scalar_select 0, %s5, %s3
  $region1: #{tpu_custom_call.1} parent=0
    #allocation2 [shape = 'u8[8192]{0}', space=vmem, size = 0x2000, scoped, tag = 'input window, operand 0, single buffered']
    #allocation3 [shape = 's32[1]{0}', space=sflag, size = 0x4, scoped, tag = 'scoped memory for tpu_custom_call.1']
    #allocation4 [shape = 's32[1]{0}', space=sflag, size = 0x4, scoped, tag = 'scoped memory for tpu_custom_call.1']
    #allocation5 [shape = 'u8[8192]{0}', space=vmem, size = 0x2000, scoped, tag = 'output window, operand 0, single buffered']
    %7 = vsyncpa [#allocation3], 0
    %8 = vsyncpa [#allocation4], 0
    // Predicated region
    $region2: #{tpu_custom_call.1} parent=1 // pred_check
      _
    $region3: #{tpu_custom_call.1} parent=1 // pred_check_branch
      %10 = sbr.rel (0) target = $region5
    $region4: #{tpu_custom_call.1} parent=1 // pred_region
      %s12 = ssub.s32 256, 256
      %13 = vsyncadd [#allocation3], %s12
      %s14 = sshll.u32 [#allocation2], 4
      %s15 = int_to_ptr.vmem [resolvable:$true] %s14
      %20 = dma.hbm_to_vmem [thread:$0]  %s0, 256, %s15, [#allocation3], 128, 128, 8
    $region5: #{tpu_custom_call.1} parent=1 // pred_fallthru
      _
    // Predicated region
    $region6: #{tpu_custom_call.1} parent=1 // pred_check
      _
    $region7: #{tpu_custom_call.1} parent=1 // pred_check_branch
      %22 = sbr.rel (0) target = $region9
    $region8: #{tpu_custom_call.1} parent=1 // pred_region
      _
    $region9: #{tpu_custom_call.1} parent=1 // pred_fallthru
      _
    // Predicated region
    $region10: #{tpu_custom_call.1} parent=1 // pred_check
      _
    $region11: #{tpu_custom_call.1} parent=1 // pred_check_branch
      %24 = sbr.rel (0) target = $region13
    $region12: #{tpu_custom_call.1} parent=1 // pred_region
      %25 = dma.done [#allocation3], 256
    $region13: #{tpu_custom_call.1} parent=1 // pred_fallthru
      _
    %v26 = vld [vmem:[#allocation2] sm:$0xff]
    %v27 = vld [vmem:[#allocation2 + $0x8] sm:$0xff]
    %vm28 = vcmask 261120
    %v29 = vsel %vm28, %v26, 0.0
    %30 = vadd.xlane.f32.xlu0 %v29
    %v31 = vpop.xlane.xlu0 %30
    %v32 = vsel %vm28, %v27, 0.0
    %33 = vadd.xlane.f32.xlu0 %v32
    %v34 = vpop.xlane.xlu0 %33
    %v35 = vrcp.pop 32.0
    %v36 = vmul.f32 %v31, %v35
    %v37 = vmul.f32 %v34, %v35
    %v38 = vsub.f32 %v26, %v36
    %v39 = vsub.f32 %v27, %v37
    %v40 = vmul.f32 %v38, %v38
    %v41 = vmul.f32 %v39, %v39
    %v42 = vsel %vm28, %v40, 0.0
    %43 = vadd.xlane.f32.xlu0 %v42
    %v44 = vpop.xlane.xlu0 %43
    %v45 = vsel %vm28, %v41, 0.0
    %46 = vadd.xlane.f32.xlu0 %v45
    %v47 = vpop.xlane.xlu0 %46
    %v48 = vmul.f32 %v44, %v35
    %v49 = vmul.f32 %v47, %v35
    %v50 = vadd.f32 %v48, 1e-05
    %v51 = vadd.f32 %v49, 1e-05
    %v52 = vrsqrt.pop %v50
    %v53 = vrsqrt.pop %v51
    %v54 = vmul.f32 %v38, %v52
    %v55 = vmul.f32 %v39, %v53
    %v56 = vld [vmem:[%s1] sm:$0x1]
    %v57 = vadd.f32 %v56, 1.0
    %v59 = vlaneseq
    %v60 = vshrl.u32 %v59, 7
    %v61 = vsub.s32 0, %v60
    %v62 = vrot.slane %v57, %v61
    %v64 = vmul.f32 %v54, %v62
    %v65 = vmul.f32 %v55, %v62
    %66 = vst.msk [vmem:[#allocation5] sm:$0xff] %vm28, %v64
    %67 = vst.msk [vmem:[#allocation5 + $0x8] sm:$0xff] %vm28, %v65
    // Predicated region
    $region14: #{tpu_custom_call.1} parent=1 // pred_check
      _
    $region15: #{tpu_custom_call.1} parent=1 // pred_check_branch
      %69 = sbr.rel (0) target = $region17
    $region16: #{tpu_custom_call.1} parent=1 // pred_region
      %s71 = ssub.s32 256, 256
      %72 = vsyncadd [#allocation4], %s71
      %s73 = sshll.u32 [#allocation5], 4
      %s74 = int_to_ptr.vmem [resolvable:$true] %s73
      %79 = dma.vmem_to_hbm [thread:$0]  %s74, 256, %s2, [#allocation4], 128, 128, 8
    $region17: #{tpu_custom_call.1} parent=1 // pred_fallthru
      _
    // Predicated region
    $region18: #{tpu_custom_call.1} parent=1 // pred_check
      _
    $region19: #{tpu_custom_call.1} parent=1 // pred_check_branch
      %81 = sbr.rel (0) target = $region21
    $region20: #{tpu_custom_call.1} parent=1 // pred_region
      %82 = dma.done [#allocation4], 256
    $region21: #{tpu_custom_call.1} parent=1 // pred_fallthru
      _
    %83 = vsyncpa [#allocation3], 1
    %84 = vsyncpa [#allocation4], 1

</llo_original>
